<compile_context>
chip_gen: v7x
topology: tpu7x:2x2x1
jax: 0.10.0
libtpu: 0.0.40
codegen_flags: <defaults>
</compile_context>

<pallas_src>
import jax
import jax.numpy as jnp
from jax.experimental import pallas as pl
from jax.experimental.pallas import tpu as pltpu


def _round_up(x, m):
    return ((x + m - 1) // m) * m


# ----------------------------------------------------------------------------
# Fused kernel factory.
# ----------------------------------------------------------------------------
def _make_fused_kps_loss_kernel(n_total, dc_total, dr_total,
                                tn, tdc, tdr, gn, gd):
    need_row_mask = (n_total % tn) != 0
    # dr_total % tdr != 0  <=>  dc_total % tdc != 0  (both exactly doubled).
    need_lane_mask = (dc_total % tdc) != 0

    def kernel(cls_pred_ref, cls_label_ref, cls_w_ref,
               reg_pred_ref, reg_label_ref, reg_w_ref,
               out_ref,
               cls_loss_acc, cls_wsum_acc, reg_loss_acc, reg_wsum_acc):
        ni = pl.program_id(0)
        dj = pl.program_id(1)

        @pl.when(dj == 0)
        def _init():
            cls_loss_acc[...] = jnp.zeros_like(cls_loss_acc)
            cls_wsum_acc[...] = jnp.zeros_like(cls_wsum_acc)
            reg_loss_acc[...] = jnp.zeros_like(reg_loss_acc)
            reg_wsum_acc[...] = jnp.zeros_like(reg_wsum_acc)

        # ---- losses, computed unmasked (single widening cast after DMA) ----
        x = cls_pred_ref[...].astype(jnp.float32)
        z = cls_label_ref[...].astype(jnp.float32)
        cw = cls_w_ref[...].astype(jnp.float32)
        # Numerically stable sigmoid BCE-with-logits:
        #   max(x,0) - x*z + log1p(exp(-|x|))
        bce = jnp.maximum(x, 0.0) - x * z + jnp.log1p(jnp.exp(-jnp.abs(x)))
        cls_lw = bce * cw

        p = reg_pred_ref[...].astype(jnp.float32)
        t = reg_label_ref[...].astype(jnp.float32)
        rw = reg_w_ref[...].astype(jnp.float32)
        diff = p - t
        adiff = jnp.abs(diff)
        sl1 = jnp.where(adiff < 1.0, 0.5 * diff * diff, adiff - 0.5)
        reg_lw = sl1 * rw

        def _accumulate(c_lw, c_w, r_lw, r_w):
            cls_loss_acc[...] += jnp.sum(c_lw, axis=1, keepdims=True)
            cls_wsum_acc[...] += jnp.sum(c_w, axis=1, keepdims=True)
            reg_loss_acc[...] += jnp.sum(r_lw, axis=1, keepdims=True)
            reg_wsum_acc[...] += jnp.sum(r_w, axis=1, keepdims=True)

        if need_row_mask or need_lane_mask:
            # Runtime edge-tile detection: interior tiles stay fully unmasked.
            conds = []
            if need_lane_mask:
                conds.append(dj == gd - 1)
            if need_row_mask:
                conds.append(ni == gn - 1)
            is_edge = conds[0]
            for c in conds[1:]:
                is_edge = jnp.logical_or(is_edge, c)

            def _edge_mask(tile_d, lane_limit):
                mask = None
                if need_lane_mask:
                    lane = jax.lax.broadcasted_iota(jnp.int32, (tn, tile_d), 1)
                    mask = lane < lane_limit
                if need_row_mask:
                    row = jax.lax.broadcasted_iota(jnp.int32, (tn, tile_d), 0)
                    rmask = row < (n_total - ni * tn)
                    mask = rmask if mask is None else jnp.logical_and(mask, rmask)
                return mask

            @pl.when(is_edge)
            def _masked():
                zero = jnp.zeros((), jnp.float32)
                cmask = _edge_mask(tdc, dc_total - dj * tdc)
                rmask = _edge_mask(tdr, dr_total - dj * tdr)
                # Mask AFTER the loss math: select drops NaN/Inf from garbage
                # OOB lanes/rows without letting them propagate into the sums.
                _accumulate(jnp.where(cmask, cls_lw, zero),
                            jnp.where(cmask, cw, zero),
                            jnp.where(rmask, reg_lw, zero),
                            jnp.where(rmask, rw, zero))

            @pl.when(jnp.logical_not(is_edge))
            def _interior():
                _accumulate(cls_lw, cw, reg_lw, rw)
        else:
            _accumulate(cls_lw, cw, reg_lw, rw)

        @pl.when(dj == gd - 1)
        def _finalize():
            cls_l = jnp.sum(cls_loss_acc[...], keepdims=True)          # (1,1)
            cls_c = jnp.sum((cls_wsum_acc[...] > 0.0).astype(jnp.float32),
                            keepdims=True)
            reg_l = jnp.sum(reg_loss_acc[...], keepdims=True)
            reg_c = jnp.sum((reg_wsum_acc[...] > 0.0).astype(jnp.float32),
                            keepdims=True)
            lane = jax.lax.broadcasted_iota(jnp.int32, (1, 128), 1)
            out = jnp.where(lane == 0, cls_l, 0.0)
            out = jnp.where(lane == 1, cls_c, out)
            out = jnp.where(lane == 2, reg_l, out)
            out = jnp.where(lane == 3, reg_c, out)
            out_ref[...] = out

    return kernel


# ----------------------------------------------------------------------------
# Tile selection helpers.
# ----------------------------------------------------------------------------
def _dtype_sublane_unit(dtypes):
    """Sublane packing unit of the narrowest input (f32->8, bf16->16, i8->32)."""
    unit = 8
    for dt in dtypes:
        unit = max(unit, 32 // max(1, jnp.dtype(dt).itemsize))
    return unit


def _pick_row_tile(n, unit, cap):
    cap = max(unit, (cap // unit) * unit)
    if n <= unit:
        return n                       # full-extent row block (always legal)
    # Aim for >= 2 row tiles so both v7x TensorCores get a "parallel" tile.
    return min(cap, _round_up(pl.cdiv(n, 2), unit))


def _pick_lane_tile(dc, cap):
    if dc <= cap:
        return dc                      # full-extent lane block (always legal)
    return max(128, (cap // 128) * 128)


# ----------------------------------------------------------------------------
# Wrapper: one fused pallas_call + tiny JAX epilogue.
# ----------------------------------------------------------------------------
def _fused_kps_loss(cls_pred, cls_label, cls_weight,
                    reg_pred, reg_label, reg_weight, *,
                    tile_n_cap=128, tile_dc_cap=4096,
                    vmem_input_budget_bytes=44 << 20):
    n, dc = cls_pred.shape
    n_r, dr = reg_pred.shape
    assert n_r == n and dr == 2 * dc, (cls_pred.shape, reg_pred.shape)

    cls_inputs = (cls_pred, cls_label, cls_weight)
    reg_inputs = (reg_pred, reg_label, reg_weight)
    inputs = cls_inputs + reg_inputs

    unit = _dtype_sublane_unit([a.dtype for a in inputs])
    tn = _pick_row_tile(n, unit, tile_n_cap)
    gn = pl.cdiv(n, tn)

    # Lane tile for cls; reg streams 2x-wide tiles (reg D == 2 * cls D).
    # Keep the double-buffered 6-input working set under the VMEM budget
    # (v7x has only 64 MiB of VMEM per TensorCore).
    cls_bytes = sum(jnp.dtype(a.dtype).itemsize for a in cls_inputs)
    reg_bytes = sum(jnp.dtype(a.dtype).itemsize for a in reg_inputs)
    per_tdc_bytes = 2 * tn * (cls_bytes + 2 * reg_bytes)   # double-buffered
    budget_tdc = max(128, (vmem_input_budget_bytes // per_tdc_bytes) // 128 * 128)
    tdc = _pick_lane_tile(dc, min(tile_dc_cap, budget_tdc))
    tdr = 2 * tdc
    gd = pl.cdiv(dc, tdc)

    kernel = _make_fused_kps_loss_kernel(n, dc, dr, tn, tdc, tdr, gn, gd)

    in_specs = (
        [pl.BlockSpec((tn, tdc), lambda i, j: (i, j)) for _ in range(3)]
        + [pl.BlockSpec((tn, tdr), lambda i, j: (i, j)) for _ in range(3)])

    grid_spec = pltpu.PrefetchScalarGridSpec(
        num_scalar_prefetch=0,
        grid=(gn, gd),
        in_specs=in_specs,
        out_specs=pl.BlockSpec((1, 128), lambda i, j: (i, 0)),
        scratch_shapes=[pltpu.VMEM((tn, 1), jnp.float32) for _ in range(4)],
    )

    vmem_bytes = tdc * per_tdc_bytes            # double-buffered input tiles
    vmem_bytes += 4 * tn * 4 + 2 * 128 * 4      # accumulators + output buffers
    vmem_bytes += 8 << 20                       # compiler headroom

    cost = pl.CostEstimate(
        flops=10 * n * dc + 8 * n * dr,
        transcendentals=2 * n * dc,
        bytes_accessed=sum(a.size * jnp.dtype(a.dtype).itemsize
                           for a in inputs) + gn * 128 * 4,
    )

    partials = pl.pallas_call(
        kernel,
        out_shape=jax.ShapeDtypeStruct((gn, 128), jnp.float32),
        grid_spec=grid_spec,
        compiler_params=pltpu.CompilerParams(
            dimension_semantics=("parallel", "arbitrary"),
            vmem_limit_bytes=int(vmem_bytes)),
        cost_estimate=cost,
    )(*inputs)

    # Tiny epilogue: one reduction over per-N-tile partials, then normalize.
    sums = jnp.sum(partials, axis=0)
    cls_loss = sums[0] / (sums[1] + 1e-6)
    reg_loss = sums[2] / (sums[3] + 1e-6)
    return cls_loss, reg_loss


class RCNNKPSLossPallas:
    """Pallas re-implementation of RCNNKPSLoss.forward (no trainable params).

    cls_loss := sigmoid BCE-with-logits, reg_loss := SmoothL1(beta=1), both
    element-weighted and normalized by (#positive-weight samples + 1e-6).
    """

    def __init__(self, kps_num: int, feat_height: int, feat_width: int, *,
                 tile_n_cap: int = 128, tile_dc_cap: int = 4096):
        self.kps_num = kps_num
        self.feat_height = feat_height
        self.feat_width = feat_width
        self.tile_n_cap = tile_n_cap
        self.tile_dc_cap = tile_dc_cap

    def __call__(self, preds, labels):
        K, H, W = self.kps_num, self.feat_height, self.feat_width
        Dc = K * H * W
        Dr = 2 * Dc

        # No dtype widening here: native (possibly narrow) dtypes go straight
        # into the kernel; the .float() of the reference happens in-kernel.
        cls_pred = preds["kps_rcnn_cls_pred"].reshape(-1, Dc)
        reg_pred = preds["kps_rcnn_reg_pred"].reshape(-1, Dr)
        cls_label = labels["kps_cls_label"].reshape(-1, Dc)
        cls_weight = labels["kps_cls_label_weight"].reshape(-1, Dc)
        reg_label = labels["kps_reg_label"].reshape(-1, Dr)
        reg_weight = labels["kps_reg_label_weight"].reshape(-1, Dr)

        cls_loss, reg_loss = _fused_kps_loss(
            cls_pred, cls_label, cls_weight,
            reg_pred, reg_label, reg_weight,
            tile_n_cap=self.tile_n_cap, tile_dc_cap=self.tile_dc_cap)

        return {
            "rcnn_kps_class_loss": cls_loss,
            "rcnn_kps_reg_loss": reg_loss,
        }


# ----------------------------------------------------------------------------
# Pure-JAX reference mirroring the PyTorch semantics (for verification).
# ----------------------------------------------------------------------------
def _reference(preds, labels, kps_num, H, W):
    K = kps_num
    Dc = K * H * W
    Dr = 2 * Dc
    x = preds["kps_rcnn_cls_pred"].astype(jnp.float32).reshape(-1, Dc)
    z = labels["kps_cls_label"].astype(jnp.float32).reshape(-1, Dc)
    w = labels["kps_cls_label_weight"].astype(jnp.float32).reshape(-1, Dc)
    bce = jnp.maximum(x, 0.0) - x * z + jnp.log1p(jnp.exp(-jnp.abs(x)))
    cls_af = jnp.sum((w.sum(axis=1) > 0).astype(jnp.float32)) + 1e-6
    cls_loss = jnp.sum(bce * w) / cls_af

    p = preds["kps_rcnn_reg_pred"].astype(jnp.float32).reshape(-1, Dr)
    t = labels["kps_reg_label"].astype(jnp.float32).reshape(-1, Dr)
    rw = labels["kps_reg_label_weight"].astype(jnp.float32).reshape(-1, Dr)
    d = jnp.abs(p - t)
    sl1 = jnp.where(d < 1.0, 0.5 * d * d, d - 0.5)
    reg_af = jnp.sum((rw.sum(axis=1) > 0).astype(jnp.float32)) + 1e-6
    reg_loss = jnp.sum(sl1 * rw) / reg_af
    return cls_loss, reg_loss


if __name__ == "__main__":
    def _run_case(N, K, H, W, label_dtype, tile_n_cap, tile_dc_cap):
        key = jax.random.PRNGKey(0)
        k1, k2, k3, k4, k5, k6 = jax.random.split(key, 6)
        Dc, Dr = K * H * W, 2 * K * H * W
        preds = {
            "kps_rcnn_cls_pred": jax.random.normal(k1, (N, K, H, W), jnp.float32),
            "kps_rcnn_reg_pred": jax.random.normal(k2, (N, 2 * K, H, W), jnp.float32),
        }
        labels = {
            # labels arrive flattened; the module's .view() reshapes them.
            "kps_cls_label":
                (jax.random.uniform(k3, (N, Dc)) > 0.5).astype(label_dtype),
            "kps_cls_label_weight":
                (jax.random.uniform(k4, (N, Dc)) > 0.3).astype(label_dtype),
            "kps_reg_label":
                jax.random.normal(k5, (N, Dr), jnp.float32).astype(label_dtype),
            "kps_reg_label_weight":
                (jax.random.uniform(k6, (N, Dr)) > 0.3).astype(label_dtype),
        }
        mod = RCNNKPSLossPallas(K, H, W, tile_n_cap=tile_n_cap,
                                tile_dc_cap=tile_dc_cap)
        out = jax.block_until_ready(mod(preds, labels))
        ref_cls, ref_reg = _reference(preds, labels, K, H, W)
        assert jnp.allclose(out["rcnn_kps_class_loss"], ref_cls,
                            rtol=1e-5, atol=1e-5), \
            (out["rcnn_kps_class_loss"], ref_cls)
        assert jnp.allclose(out["rcnn_kps_reg_loss"], ref_reg,
                            rtol=1e-5, atol=1e-5), \
            (out["rcnn_kps_reg_loss"], ref_reg)

    # Case 1: canonical small shapes (batch=2, kps=4, feat 16x16), f32 labels;
    # single full-extent block (gn=1, gd=1), fully unmasked fast path.
    _run_case(N=2, K=4, H=16, W=16, label_dtype=jnp.float32,
              tile_n_cap=128, tile_dc_cap=4096)

    # Case 2: forced multi-tile grid with N and D NOT multiples of the tile
    # sizes -> exercises >=2 "parallel" row tiles, runtime edge-tile masking
    # under pl.when, and the lane-dense per-N-tile partial-output path.
    _run_case(N=20, K=3, H=12, W=12, label_dtype=jnp.float32,
              tile_n_cap=8, tile_dc_cap=256)

    # Case 3: narrow (bf16) labels/weights -> dtype-aware sublane unit and
    # in-kernel widening; single-block grid.
    _run_case(N=10, K=4, H=16, W=16, label_dtype=jnp.bfloat16,
              tile_n_cap=128, tile_dc_cap=4096)

    print("KERNEL_OK")
</pallas_src>

<mosaic_0001>
module attributes {stable_mosaic.version = 11 : i64} {
  func.func @kernel(%arg0: i32, %arg1: i32, %arg2: memref<2x1024xf32, #tpu.memory_space<vmem>>, %arg3: memref<2x1024xf32, #tpu.memory_space<vmem>>, %arg4: memref<2x1024xf32, #tpu.memory_space<vmem>>, %arg5: memref<2x2048xf32, #tpu.memory_space<vmem>>, %arg6: memref<2x2048xf32, #tpu.memory_space<vmem>>, %arg7: memref<2x2048xf32, #tpu.memory_space<vmem>>, %arg8: memref<1x128xf32, #tpu.memory_space<vmem>>, %arg9: memref<2x1xf32, #tpu.memory_space<vmem>>, %arg10: memref<2x1xf32, #tpu.memory_space<vmem>>, %arg11: memref<2x1xf32, #tpu.memory_space<vmem>>, %arg12: memref<2x1xf32, #tpu.memory_space<vmem>>) attributes {dimension_semantics = [#tpu.dimension_semantics<parallel>, #tpu.dimension_semantics<arbitrary>], iteration_bounds = array<i64: 1, 1>, scalar_prefetch = 0 : i64, scratch_operands = 4 : i64, tpu.core_type = #tpu.core_type<tc>, window_params = [{transform_indices = @transform_0, window_bounds = array<i64: 2, 1024>}, {transform_indices = @transform_1, window_bounds = array<i64: 2, 1024>}, {transform_indices = @transform_2, window_bounds = array<i64: 2, 1024>}, {transform_indices = @transform_3, window_bounds = array<i64: 2, 2048>}, {transform_indices = @transform_4, window_bounds = array<i64: 2, 2048>}, {transform_indices = @transform_5, window_bounds = array<i64: 2, 2048>}, {transform_indices = @transform_6, window_bounds = array<i64: 1, 128>}]} {
    %c0_i32 = arith.constant 0 : i32
    %0 = arith.cmpi eq, %arg1, %c0_i32 : i32
    %1 = arith.extui %0 : i1 to i32
    %c0_i32_0 = arith.constant 0 : i32
    %2 = arith.cmpi ne, %1, %c0_i32_0 : i32
    scf.if %2 {
      %cst_38 = arith.constant 0.000000e+00 : f32
      %54 = vector.broadcast %cst_38 : f32 to vector<2x1xf32>
      %c0_39 = arith.constant 0 : index
      %c0_40 = arith.constant 0 : index
      %55 = vector.load %arg9[%c0_39, %c0_40] : memref<2x1xf32, #tpu.memory_space<vmem>>, vector<2x1xf32>
      tpu.vector_store %arg9[%c0_39, %c0_40], %54 {strides = array<i32>} : memref<2x1xf32, #tpu.memory_space<vmem>>, vector<2x1xf32>,
      %cst_41 = arith.constant 0.000000e+00 : f32
      %56 = vector.broadcast %cst_41 : f32 to vector<2x1xf32>
      %c0_42 = arith.constant 0 : index
      %c0_43 = arith.constant 0 : index
      %57 = vector.load %arg10[%c0_42, %c0_43] : memref<2x1xf32, #tpu.memory_space<vmem>>, vector<2x1xf32>
      tpu.vector_store %arg10[%c0_42, %c0_43], %56 {strides = array<i32>} : memref<2x1xf32, #tpu.memory_space<vmem>>, vector<2x1xf32>,
      %cst_44 = arith.constant 0.000000e+00 : f32
      %58 = vector.broadcast %cst_44 : f32 to vector<2x1xf32>
      %c0_45 = arith.constant 0 : index
      %c0_46 = arith.constant 0 : index
      %59 = vector.load %arg11[%c0_45, %c0_46] : memref<2x1xf32, #tpu.memory_space<vmem>>, vector<2x1xf32>
      tpu.vector_store %arg11[%c0_45, %c0_46], %58 {strides = array<i32>} : memref<2x1xf32, #tpu.memory_space<vmem>>, vector<2x1xf32>,
      %cst_47 = arith.constant 0.000000e+00 : f32
      %60 = vector.broadcast %cst_47 : f32 to vector<2x1xf32>
      %c0_48 = arith.constant 0 : index
      %c0_49 = arith.constant 0 : index
      %61 = vector.load %arg12[%c0_48, %c0_49] : memref<2x1xf32, #tpu.memory_space<vmem>>, vector<2x1xf32>
      tpu.vector_store %arg12[%c0_48, %c0_49], %60 {strides = array<i32>} : memref<2x1xf32, #tpu.memory_space<vmem>>, vector<2x1xf32>,
    } else {
    }
    %c0 = arith.constant 0 : index
    %c0_1 = arith.constant 0 : index
    %3 = vector.load %arg2[%c0, %c0_1] : memref<2x1024xf32, #tpu.memory_space<vmem>>, vector<2x1024xf32>
    %c0_2 = arith.constant 0 : index
    %c0_3 = arith.constant 0 : index
    %4 = vector.load %arg3[%c0_2, %c0_3] : memref<2x1024xf32, #tpu.memory_space<vmem>>, vector<2x1024xf32>
    %c0_4 = arith.constant 0 : index
    %c0_5 = arith.constant 0 : index
    %5 = vector.load %arg4[%c0_4, %c0_5] : memref<2x1024xf32, #tpu.memory_space<vmem>>, vector<2x1024xf32>
    %cst = arith.constant 0.000000e+00 : f32
    %6 = vector.broadcast %cst : f32 to vector<2x1024xf32>
    %7 = arith.maximumf %3, %6 : vector<2x1024xf32>
    %8 = arith.mulf %3, %4 : vector<2x1024xf32>
    %9 = arith.subf %7, %8 : vector<2x1024xf32>
    %10 = math.absf %3 : vector<2x1024xf32>
    %cst_6 = arith.constant 0.000000e+00 : f32
    %11 = vector.broadcast %cst_6 : f32 to vector<2x1024xf32>
    %12 = arith.subf %11, %10 : vector<2x1024xf32>
    %13 = math.exp %12 : vector<2x1024xf32>
    %14 = math.log1p %13 : vector<2x1024xf32>
    %15 = arith.addf %9, %14 : vector<2x1024xf32>
    %16 = arith.mulf %15, %5 : vector<2x1024xf32>
    %c0_7 = arith.constant 0 : index
    %c0_8 = arith.constant 0 : index
    %17 = vector.load %arg5[%c0_7, %c0_8] : memref<2x2048xf32, #tpu.memory_space<vmem>>, vector<2x2048xf32>
    %c0_9 = arith.constant 0 : index
    %c0_10 = arith.constant 0 : index
    %18 = vector.load %arg6[%c0_9, %c0_10] : memref<2x2048xf32, #tpu.memory_space<vmem>>, vector<2x2048xf32>
    %c0_11 = arith.constant 0 : index
    %c0_12 = arith.constant 0 : index
    %19 = vector.load %arg7[%c0_11, %c0_12] : memref<2x2048xf32, #tpu.memory_space<vmem>>, vector<2x2048xf32>
    %20 = arith.subf %17, %18 : vector<2x2048xf32>
    %21 = math.absf %20 : vector<2x2048xf32>
    %cst_13 = arith.constant 1.000000e+00 : f32
    %22 = vector.broadcast %cst_13 : f32 to vector<2x2048xf32>
    %23 = arith.cmpf olt, %21, %22 : vector<2x2048xf32>
    %cst_14 = arith.constant 5.000000e-01 : f32
    %24 = vector.broadcast %cst_14 : f32 to vector<2x2048xf32>
    %25 = arith.mulf %24, %20 : vector<2x2048xf32>
    %26 = arith.mulf %25, %20 : vector<2x2048xf32>
    %cst_15 = arith.constant 5.000000e-01 : f32
    %27 = vector.broadcast %cst_15 : f32 to vector<2x2048xf32>
    %28 = arith.subf %21, %27 : vector<2x2048xf32>
    %29 = arith.select %23, %26, %28 : vector<2x2048xi1>, vector<2x2048xf32>
    %30 = arith.mulf %29, %19 : vector<2x2048xf32>
    %c0_16 = arith.constant 0 : index
    %c0_17 = arith.constant 0 : index
    %31 = vector.load %arg9[%c0_16, %c0_17] : memref<2x1xf32, #tpu.memory_space<vmem>>, vector<2x1xf32>
    %cst_18 = arith.constant dense<0.000000e+00> : vector<2xf32>
    %32 = vector.multi_reduction <add>, %16, %cst_18 [1] : vector<2x1024xf32> to vector<2xf32>
    %33 = vector.shape_cast %32 : vector<2xf32> to vector<2x1xf32>
    %34 = arith.addf %31, %33 : vector<2x1xf32>
    %c0_19 = arith.constant 0 : index
    %c0_20 = arith.constant 0 : index
    %35 = vector.load %arg9[%c0_19, %c0_20] : memref<2x1xf32, #tpu.memory_space<vmem>>, vector<2x1xf32>
    tpu.vector_store %arg9[%c0_19, %c0_20], %34 {strides = array<i32>} : memref<2x1xf32, #tpu.memory_space<vmem>>, vector<2x1xf32>,
    %c0_21 = arith.constant 0 : index
    %c0_22 = arith.constant 0 : index
    %36 = vector.load %arg10[%c0_21, %c0_22] : memref<2x1xf32, #tpu.memory_space<vmem>>, vector<2x1xf32>
    %cst_23 = arith.constant dense<0.000000e+00> : vector<2xf32>
    %37 = vector.multi_reduction <add>, %5, %cst_23 [1] : vector<2x1024xf32> to vector<2xf32>
    %38 = vector.shape_cast %37 : vector<2xf32> to vector<2x1xf32>
    %39 = arith.addf %36, %38 : vector<2x1xf32>
    %c0_24 = arith.constant 0 : index
    %c0_25 = arith.constant 0 : index
    %40 = vector.load %arg10[%c0_24, %c0_25] : memref<2x1xf32, #tpu.memory_space<vmem>>, vector<2x1xf32>
    tpu.vector_store %arg10[%c0_24, %c0_25], %39 {strides = array<i32>} : memref<2x1xf32, #tpu.memory_space<vmem>>, vector<2x1xf32>,
    %c0_26 = arith.constant 0 : index
    %c0_27 = arith.constant 0 : index
    %41 = vector.load %arg11[%c0_26, %c0_27] : memref<2x1xf32, #tpu.memory_space<vmem>>, vector<2x1xf32>
    %cst_28 = arith.constant dense<0.000000e+00> : vector<2xf32>
    %42 = vector.multi_reduction <add>, %30, %cst_28 [1] : vector<2x2048xf32> to vector<2xf32>
    %43 = vector.shape_cast %42 : vector<2xf32> to vector<2x1xf32>
    %44 = arith.addf %41, %43 : vector<2x1xf32>
    %c0_29 = arith.constant 0 : index
    %c0_30 = arith.constant 0 : index
    %45 = vector.load %arg11[%c0_29, %c0_30] : memref<2x1xf32, #tpu.memory_space<vmem>>, vector<2x1xf32>
    tpu.vector_store %arg11[%c0_29, %c0_30], %44 {strides = array<i32>} : memref<2x1xf32, #tpu.memory_space<vmem>>, vector<2x1xf32>,
    %c0_31 = arith.constant 0 : index
    %c0_32 = arith.constant 0 : index
    %46 = vector.load %arg12[%c0_31, %c0_32] : memref<2x1xf32, #tpu.memory_space<vmem>>, vector<2x1xf32>
    %cst_33 = arith.constant dense<0.000000e+00> : vector<2xf32>
    %47 = vector.multi_reduction <add>, %19, %cst_33 [1] : vector<2x2048xf32> to vector<2xf32>
    %48 = vector.shape_cast %47 : vector<2xf32> to vector<2x1xf32>
    %49 = arith.addf %46, %48 : vector<2x1xf32>
    %c0_34 = arith.constant 0 : index
    %c0_35 = arith.constant 0 : index
    %50 = vector.load %arg12[%c0_34, %c0_35] : memref<2x1xf32, #tpu.memory_space<vmem>>, vector<2x1xf32>
    tpu.vector_store %arg12[%c0_34, %c0_35], %49 {strides = array<i32>} : memref<2x1xf32, #tpu.memory_space<vmem>>, vector<2x1xf32>,
    %c0_i32_36 = arith.constant 0 : i32
    %51 = arith.cmpi eq, %arg1, %c0_i32_36 : i32
    %52 = arith.extui %51 : i1 to i32
    %c0_i32_37 = arith.constant 0 : i32
    %53 = arith.cmpi ne, %52, %c0_i32_37 : i32
    scf.if %53 {
      %c0_38 = arith.constant 0 : index
      %c0_39 = arith.constant 0 : index
      %54 = vector.load %arg9[%c0_38, %c0_39] : memref<2x1xf32, #tpu.memory_space<vmem>>, vector<2x1xf32>
      %55 = vector.shape_cast %54 : vector<2x1xf32> to vector<1x2x1xf32>
      %cst_40 = arith.constant dense<0.000000e+00> : vector<1xf32>
      %56 = vector.multi_reduction <add>, %55, %cst_40 [1, 2] : vector<1x2x1xf32> to vector<1xf32>
      %57 = vector.shape_cast %56 : vector<1xf32> to vector<1x1x1xf32>
      %58 = vector.extract %57[0, 0, 0] : f32 from vector<1x1x1xf32>
      %59 = vector.broadcast %58 : f32 to vector<1x1xf32>
      %c0_41 = arith.constant 0 : index
      %c0_42 = arith.constant 0 : index
      %60 = vector.load %arg10[%c0_41, %c0_42] : memref<2x1xf32, #tpu.memory_space<vmem>>, vector<2x1xf32>
      %cst_43 = arith.constant 0.000000e+00 : f32
      %61 = vector.broadcast %cst_43 : f32 to vector<2x1xf32>
      %62 = arith.cmpf ogt, %60, %61 : vector<2x1xf32>
      %63 = arith.extui %62 : vector<2x1xi1> to vector<2x1xi32>
      %64 = arith.sitofp %63 : vector<2x1xi32> to vector<2x1xf32>
      %65 = vector.shape_cast %64 : vector<2x1xf32> to vector<1x2x1xf32>
      %cst_44 = arith.constant dense<0.000000e+00> : vector<1xf32>
      %66 = vector.multi_reduction <add>, %65, %cst_44 [1, 2] : vector<1x2x1xf32> to vector<1xf32>
      %67 = vector.shape_cast %66 : vector<1xf32> to vector<1x1x1xf32>
      %68 = vector.extract %67[0, 0, 0] : f32 from vector<1x1x1xf32>
      %69 = vector.broadcast %68 : f32 to vector<1x1xf32>
      %c0_45 = arith.constant 0 : index
      %c0_46 = arith.constant 0 : index
      %70 = vector.load %arg11[%c0_45, %c0_46] : memref<2x1xf32, #tpu.memory_space<vmem>>, vector<2x1xf32>
      %71 = vector.shape_cast %70 : vector<2x1xf32> to vector<1x2x1xf32>
      %cst_47 = arith.constant dense<0.000000e+00> : vector<1xf32>
      %72 = vector.multi_reduction <add>, %71, %cst_47 [1, 2] : vector<1x2x1xf32> to vector<1xf32>
      %73 = vector.shape_cast %72 : vector<1xf32> to vector<1x1x1xf32>
      %74 = vector.extract %73[0, 0, 0] : f32 from vector<1x1x1xf32>
      %75 = vector.broadcast %74 : f32 to vector<1x1xf32>
      %c0_48 = arith.constant 0 : index
      %c0_49 = arith.constant 0 : index
      %76 = vector.load %arg12[%c0_48, %c0_49] : memref<2x1xf32, #tpu.memory_space<vmem>>, vector<2x1xf32>
      %cst_50 = arith.constant 0.000000e+00 : f32
      %77 = vector.broadcast %cst_50 : f32 to vector<2x1xf32>
      %78 = arith.cmpf ogt, %76, %77 : vector<2x1xf32>
      %79 = arith.extui %78 : vector<2x1xi1> to vector<2x1xi32>
      %80 = arith.sitofp %79 : vector<2x1xi32> to vector<2x1xf32>
      %81 = vector.shape_cast %80 : vector<2x1xf32> to vector<1x2x1xf32>
      %cst_51 = arith.constant dense<0.000000e+00> : vector<1xf32>
      %82 = vector.multi_reduction <add>, %81, %cst_51 [1, 2] : vector<1x2x1xf32> to vector<1xf32>
      %83 = vector.shape_cast %82 : vector<1xf32> to vector<1x1x1xf32>
      %84 = vector.extract %83[0, 0, 0] : f32 from vector<1x1x1xf32>
      %85 = vector.broadcast %84 : f32 to vector<1x1xf32>
      %86 = tpu.iota {dimensions = array<i32: 1>} : vector<1x128xi32>
      %c0_i32_52 = arith.constant 0 : i32
      %87 = vector.broadcast %c0_i32_52 : i32 to vector<1x128xi32>
      %88 = arith.cmpi eq, %86, %87 : vector<1x128xi32>
      %cst_53 = arith.constant 0.000000e+00 : f32
      %89 = vector.shape_cast %59 : vector<1x1xf32> to vector<1x1xf32>
      %90 = vector.broadcast %89 : vector<1x1xf32> to vector<1x128xf32>
      %91 = vector.broadcast %cst_53 : f32 to vector<1x128xf32>
      %92 = arith.select %88, %90, %91 : vector<1x128xi1>, vector<1x128xf32>
      %c1_i32 = arith.constant 1 : i32
      %93 = vector.broadcast %c1_i32 : i32 to vector<1x128xi32>
      %94 = arith.cmpi eq, %86, %93 : vector<1x128xi32>
      %95 = vector.shape_cast %69 : vector<1x1xf32> to vector<1x1xf32>
      %96 = vector.broadcast %95 : vector<1x1xf32> to vector<1x128xf32>
      %97 = arith.select %94, %96, %92 : vector<1x128xi1>, vector<1x128xf32>
      %c2_i32 = arith.constant 2 : i32
      %98 = vector.broadcast %c2_i32 : i32 to vector<1x128xi32>
      %99 = arith.cmpi eq, %86, %98 : vector<1x128xi32>
      %100 = vector.shape_cast %75 : vector<1x1xf32> to vector<1x1xf32>
      %101 = vector.broadcast %100 : vector<1x1xf32> to vector<1x128xf32>
      %102 = arith.select %99, %101, %97 : vector<1x128xi1>, vector<1x128xf32>
      %c3_i32 = arith.constant 3 : i32
      %103 = vector.broadcast %c3_i32 : i32 to vector<1x128xi32>
      %104 = arith.cmpi eq, %86, %103 : vector<1x128xi32>
      %105 = vector.shape_cast %85 : vector<1x1xf32> to vector<1x1xf32>
      %106 = vector.broadcast %105 : vector<1x1xf32> to vector<1x128xf32>
      %107 = arith.select %104, %106, %102 : vector<1x128xi1>, vector<1x128xf32>
      %c0_54 = arith.constant 0 : index
      %c0_55 = arith.constant 0 : index
      %108 = vector.load %arg8[%c0_54, %c0_55] : memref<1x128xf32, #tpu.memory_space<vmem>>, vector<1x128xf32>
      tpu.vector_store %arg8[%c0_54, %c0_55], %107 {strides = array<i32>} : memref<1x128xf32, #tpu.memory_space<vmem>>, vector<1x128xf32>,
    } else {
    }
    return
  }
  func.func @transform_0(%arg0: i32, %arg1: i32) -> (i32, i32) {
    %c0_i32 = arith.constant 0 : i32
    return %arg0, %arg1 : i32, i32
  }
  func.func @transform_1(%arg0: i32, %arg1: i32) -> (i32, i32) {
    %c0_i32 = arith.constant 0 : i32
    return %arg0, %arg1 : i32, i32
  }
  func.func @transform_2(%arg0: i32, %arg1: i32) -> (i32, i32) {
    %c0_i32 = arith.constant 0 : i32
    return %arg0, %arg1 : i32, i32
  }
  func.func @transform_3(%arg0: i32, %arg1: i32) -> (i32, i32) {
    %c0_i32 = arith.constant 0 : i32
    return %arg0, %arg1 : i32, i32
  }
  func.func @transform_4(%arg0: i32, %arg1: i32) -> (i32, i32) {
    %c0_i32 = arith.constant 0 : i32
    return %arg0, %arg1 : i32, i32
  }
  func.func @transform_5(%arg0: i32, %arg1: i32) -> (i32, i32) {
    %c0_i32 = arith.constant 0 : i32
    return %arg0, %arg1 : i32, i32
  }
  func.func @transform_6(%arg0: i32, %arg1: i32) -> (i32, i32) {
    %c0_i32 = arith.constant 0 : i32
    %c0_i32_0 = arith.constant 0 : i32
    return %arg0, %c0_i32 : i32, i32
  }
}

</mosaic_0001>

<llo_original>
// kernel: tpu_custom_call.1
$region0: #{tpu_custom_call.1}
  #allocation0 [shape = 'u32[]', space=smem, size = 0x4, offset = 0x4, fixed_abs, tag = 'smem constant byte address 0x4 - core index']
  #allocation1 [shape = 'u32[144,128]{1,0:T(1,128)}', space=vmem, size = 0x12000, scoped, tag = 'internal scratch']
  #allocation2 [shape = 'f32[2,1]{1,0:T(2,128)}', space=vmem, size = 0x400, scoped, tag = 'scratch operand']
  #allocation3 [shape = 'f32[2,1]{1,0:T(2,128)}', space=vmem, size = 0x400, scoped, tag = 'scratch operand']
  #allocation4 [shape = 'f32[2,1]{1,0:T(2,128)}', space=vmem, size = 0x400, scoped, tag = 'scratch operand']
  #allocation5 [shape = 'f32[2,1]{1,0:T(2,128)}', space=vmem, size = 0x400, scoped, tag = 'scratch operand']
  %s0 = inlined_call_operand.hbm [shape: f32[2,1024], index: 0, kind: input, shape index: {}]
  %s1 = inlined_call_operand.hbm [shape: f32[2,1024], index: 1, kind: input, shape index: {}]
  %s2 = inlined_call_operand.hbm [shape: f32[2,1024], index: 2, kind: input, shape index: {}]
  %s3 = inlined_call_operand.hbm [shape: f32[2,2048], index: 3, kind: input, shape index: {}]
  %s4 = inlined_call_operand.hbm [shape: f32[2,2048], index: 4, kind: input, shape index: {}]
  %s5 = inlined_call_operand.hbm [shape: f32[2,2048], index: 5, kind: input, shape index: {}]
  %s6 = inlined_call_operand.hbm [shape: f32[1,128], index: 6, kind: output, shape index: {}]
  %s7 = sld [smem:[#allocation0]]
  $region66: #{tpu_custom_call.1} parent=0
    _
  %s9 = ssub.s32 1, %s7
  %s10 = scalar_select 0, %s9, %s7
  $region1: #{tpu_custom_call.1} parent=0
    #allocation6 [shape = 'u8[8192]{0}', space=vmem, size = 0x2000, scoped, tag = 'input window, operand 0, single buffered']
    #allocation7 [shape = 's32[1]{0}', space=sflag, size = 0x4, scoped, tag = 'scoped memory for tpu_custom_call.1']
    #allocation8 [shape = 's32[1]{0}', space=sflag, size = 0x4, scoped, tag = 'scoped memory for tpu_custom_call.1']
    #allocation9 [shape = 'u8[8192]{0}', space=vmem, size = 0x2000, scoped, tag = 'input window, operand 1, single buffered']
    #allocation10 [shape = 's32[1]{0}', space=sflag, size = 0x4, scoped, tag = 'scoped memory for tpu_custom_call.1']
    #allocation11 [shape = 'u8[8192]{0}', space=vmem, size = 0x2000, scoped, tag = 'input window, operand 2, single buffered']
    #allocation12 [shape = 'u8[16384]{0}', space=vmem, size = 0x4000, scoped, tag = 'input window, operand 3, single buffered']
    #allocation13 [shape = 's32[1]{0}', space=sflag, size = 0x4, scoped, tag = 'scoped memory for tpu_custom_call.1']
    #allocation14 [shape = 'u8[16384]{0}', space=vmem, size = 0x4000, scoped, tag = 'input window, operand 4, single buffered']
    #allocation15 [shape = 'u8[16384]{0}', space=vmem, size = 0x4000, scoped, tag = 'input window, operand 5, single buffered']
    #allocation16 [shape = 's32[1]{0}', space=sflag, size = 0x4, scoped, tag = 'scoped memory for tpu_custom_call.1']
    #allocation17 [shape = 'u8[512]{0}', space=vmem, size = 0x400, scoped, tag = 'output window, operand 0, single buffered']
    %11 = vsyncpa [#allocation7], 0
    %12 = vsyncpa [#allocation10], 0
    %13 = vsyncpa [#allocation13], 0
    %14 = vsyncpa [#allocation16], 0
    %15 = vsyncpa [#allocation8], 0
    // Predicated region
    $region2: #{tpu_custom_call.1} parent=1 // pred_check
      _
    $region3: #{tpu_custom_call.1} parent=1 // pred_check_branch
      %17 = sbr.rel (0) target = $region5
    $region4: #{tpu_custom_call.1} parent=1 // pred_region
      %s19 = ssub.s32 256, 256
      %20 = vsyncadd [#allocation7], %s19
      %s22 = sshll.u32 [#allocation6], 4
      %s23 = int_to_ptr.vmem [resolvable:$true] %s22
      %25 = dma.hbm_to_vmem [thread:$0]  %s0, 256, %s23, [#allocation7]
    $region5: #{tpu_custom_call.1} parent=1 // pred_fallthru
      _
    // Predicated region
    $region6: #{tpu_custom_call.1} parent=1 // pred_check
      _
    $region7: #{tpu_custom_call.1} parent=1 // pred_check_branch
      %27 = sbr.rel (0) target = $region9
    $region8: #{tpu_custom_call.1} parent=1 // pred_region
      %s29 = ssub.s32 256, 256
      %30 = vsyncadd [#allocation10], %s29
      %s32 = sshll.u32 [#allocation9], 4
      %s33 = int_to_ptr.vmem [resolvable:$true] %s32
      %35 = dma.hbm_to_vmem [thread:$0]  %s1, 256, %s33, [#allocation10]
    $region9: #{tpu_custom_call.1} parent=1 // pred_fallthru
      _
    // Predicated region
    $region10: #{tpu_custom_call.1} parent=1 // pred_check
      _
    $region11: #{tpu_custom_call.1} parent=1 // pred_check_branch
      %37 = sbr.rel (0) target = $region13
    $region12: #{tpu_custom_call.1} parent=1 // pred_region
      %s39 = ssub.s32 256, 256
      %40 = vsyncadd [#allocation10], %s39
      %s42 = sshll.u32 [#allocation11], 4
      %s43 = int_to_ptr.vmem [resolvable:$true] %s42
      %45 = dma.hbm_to_vmem [thread:$0]  %s2, 256, %s43, [#allocation10]
    $region13: #{tpu_custom_call.1} parent=1 // pred_fallthru
      _
    // Predicated region
    $region14: #{tpu_custom_call.1} parent=1 // pred_check
      _
    $region15: #{tpu_custom_call.1} parent=1 // pred_check_branch
      %47 = sbr.rel (0) target = $region17
    $region16: #{tpu_custom_call.1} parent=1 // pred_region
      %s49 = ssub.s32 512, 512
      %50 = vsyncadd [#allocation13], %s49
      %s52 = sshll.u32 [#allocation12], 4
      %s53 = int_to_ptr.vmem [resolvable:$true] %s52
      %55 = dma.hbm_to_vmem [thread:$0]  %s3, 512, %s53, [#allocation13]
    $region17: #{tpu_custom_call.1} parent=1 // pred_fallthru
      _
    // Predicated region
    $region18: #{tpu_custom_call.1} parent=1 // pred_check
      _
    $region19: #{tpu_custom_call.1} parent=1 // pred_check_branch
      %57 = sbr.rel (0) target = $region21
    $region20: #{tpu_custom_call.1} parent=1 // pred_region
      %s59 = ssub.s32 512, 512
      %60 = vsyncadd [#allocation13], %s59
      %s62 = sshll.u32 [#allocation14], 4
      %s63 = int_to_ptr.vmem [resolvable:$true] %s62
      %65 = dma.hbm_to_vmem [thread:$0]  %s4, 512, %s63, [#allocation13]
    $region21: #{tpu_custom_call.1} parent=1 // pred_fallthru
      _
    // Predicated region
    $region22: #{tpu_custom_call.1} parent=1 // pred_check
      _
    $region23: #{tpu_custom_call.1} parent=1 // pred_check_branch
      %67 = sbr.rel (0) target = $region25
    $region24: #{tpu_custom_call.1} parent=1 // pred_region
      %s69 = ssub.s32 512, 512
      %70 = vsyncadd [#allocation16], %s69
      %s72 = sshll.u32 [#allocation15], 4
      %s73 = int_to_ptr.vmem [resolvable:$true] %s72
      %75 = dma.hbm_to_vmem [thread:$0]  %s5, 512, %s73, [#allocation16]
    $region25: #{tpu_custom_call.1} parent=1 // pred_fallthru
      _
    // Predicated region
    $region26: #{tpu_custom_call.1} parent=1 // pred_check
      _
    $region27: #{tpu_custom_call.1} parent=1 // pred_check_branch
      %77 = sbr.rel (0) target = $region29
    $region28: #{tpu_custom_call.1} parent=1 // pred_region
      %78 = dma.done [#allocation7], 256
    $region29: #{tpu_custom_call.1} parent=1 // pred_fallthru
      _
    // Predicated region
    $region30: #{tpu_custom_call.1} parent=1 // pred_check
      _
    $region31: #{tpu_custom_call.1} parent=1 // pred_check_branch
      %80 = sbr.rel (0) target = $region33
    $region32: #{tpu_custom_call.1} parent=1 // pred_region
      %81 = dma.done [#allocation10], 256
    $region33: #{tpu_custom_call.1} parent=1 // pred_fallthru
      _
    // Predicated region
    $region34: #{tpu_custom_call.1} parent=1 // pred_check
      _
    $region35: #{tpu_custom_call.1} parent=1 // pred_check_branch
      %83 = sbr.rel (0) target = $region37
    $region36: #{tpu_custom_call.1} parent=1 // pred_region
      %84 = dma.done [#allocation10], 256
    $region37: #{tpu_custom_call.1} parent=1 // pred_fallthru
      _
    // Predicated region
    $region38: #{tpu_custom_call.1} parent=1 // pred_check
      _
    $region39: #{tpu_custom_call.1} parent=1 // pred_check_branch
      %86 = sbr.rel (0) target = $region41
    $region40: #{tpu_custom_call.1} parent=1 // pred_region
      %87 = dma.done [#allocation13], 512
    $region41: #{tpu_custom_call.1} parent=1 // pred_fallthru
      _
    // Predicated region
    $region42: #{tpu_custom_call.1} parent=1 // pred_check
      _
    $region43: #{tpu_custom_call.1} parent=1 // pred_check_branch
      %89 = sbr.rel (0) target = $region45
    $region44: #{tpu_custom_call.1} parent=1 // pred_region
      %90 = dma.done [#allocation13], 512
    $region45: #{tpu_custom_call.1} parent=1 // pred_fallthru
      _
    // Predicated region
    $region46: #{tpu_custom_call.1} parent=1 // pred_check
      _
    $region47: #{tpu_custom_call.1} parent=1 // pred_check_branch
      %92 = sbr.rel (0) target = $region49
    $region48: #{tpu_custom_call.1} parent=1 // pred_region
      %93 = dma.done [#allocation16], 512
    $region49: #{tpu_custom_call.1} parent=1 // pred_fallthru
      _
    %p94 = scmp.eq.s32.totalorder 0, 0
    // Predicated region
    $region50: #{tpu_custom_call.1} parent=1 // pred_check
      %p95 = pneg %p94
    $region51: #{tpu_custom_call.1} parent=1 // pred_check_branch
      %97 = sbr.rel (%p95) target = $region53
    $region52: #{tpu_custom_call.1} parent=1 // pred_region
      %vm98 = vcmask 1024
      %99 = vst.msk [vmem:[#allocation2] sm:$0x3] %vm98, 0.0
      %100 = vst.msk [vmem:[#allocation3] sm:$0x3] %vm98, 0.0
      %101 = vst.msk [vmem:[#allocation4] sm:$0x3] %vm98, 0.0
      %102 = vst.msk [vmem:[#allocation5] sm:$0x3] %vm98, 0.0
    $region53: #{tpu_custom_call.1} parent=1 // pred_fallthru
      _
    %v103 = vld [vmem:[#allocation6] sm:$0xff]
    %v104 = vld [vmem:[#allocation6 + $0x8] sm:$0xff]
    %v105 = vld [vmem:[#allocation9] sm:$0xff]
    %v106 = vld [vmem:[#allocation9 + $0x8] sm:$0xff]
    %v107 = vld [vmem:[#allocation11] sm:$0xff]
    %v108 = vld [vmem:[#allocation11 + $0x8] sm:$0xff]
    %v109 = vmax.f32 %v103, 0.0
    %v110 = vmax.f32 %v104, 0.0
    %v111 = vmul.f32 %v103, %v105
    %v112 = vmul.f32 %v104, %v106
    %v113 = vsub.f32 %v109, %v111
    %v114 = vsub.f32 %v110, %v112
    %v115 = vand.u32 2147483647, %v103
    %v116 = vand.u32 2147483647, %v104
    %v117 = vsub.f32 0.0, %v115
    %v118 = vsub.f32 0.0, %v116
    %v119 = vmul.f32 %v117, 1.442695
    %v120 = vpow.pop %v119
    %v121 = vmul.f32 %v118, 1.442695
    %v122 = vpow.pop %v121
    %v123 = vadd.f32 %v120, 1.0
    %v124 = vlog2.pop %v123
    %v125 = vmul.f32 %v124, 0.6931472
    %v126 = vmul.f32 -0.5, %v120
    %v127 = vadd.f32 %v126, 1.0
    %v128 = vmul.f32 %v127, %v120
    %v129 = vand.u32 2147483647, %v120
    %vm130 = vcmp.lt.f32.partialorder %v129, 0.0004427343
    %v131 = vsel %vm130, %v128, %v125
    %v132 = vadd.f32 %v122, 1.0
    %v133 = vlog2.pop %v132
    %v134 = vmul.f32 %v133, 0.6931472
    %v135 = vmul.f32 -0.5, %v122
    %v136 = vadd.f32 %v135, 1.0
    %v137 = vmul.f32 %v136, %v122
    %v138 = vand.u32 2147483647, %v122
    %vm139 = vcmp.lt.f32.partialorder %v138, 0.0004427343
    %v140 = vsel %vm139, %v137, %v134
    %v141 = vadd.f32 %v113, %v131
    %v142 = vadd.f32 %v114, %v140
    %v143 = vmul.f32 %v141, %v107
    %v144 = vmul.f32 %v142, %v108
    %v145 = vld [vmem:[#allocation12] sm:$0xff]
    %v146 = vld [vmem:[#allocation12 + $0x8] sm:$0xff]
    %v147 = vld [vmem:[#allocation12 + $0x10] sm:$0xff]
    %v148 = vld [vmem:[#allocation12 + $0x18] sm:$0xff]
    %v149 = vld [vmem:[#allocation14] sm:$0xff]
    %v150 = vld [vmem:[#allocation14 + $0x8] sm:$0xff]
    %v151 = vld [vmem:[#allocation14 + $0x10] sm:$0xff]
    %v152 = vld [vmem:[#allocation14 + $0x18] sm:$0xff]
    %v153 = vld [vmem:[#allocation15] sm:$0xff]
    %v154 = vld [vmem:[#allocation15 + $0x8] sm:$0xff]
    %v155 = vld [vmem:[#allocation15 + $0x10] sm:$0xff]
    %v156 = vld [vmem:[#allocation15 + $0x18] sm:$0xff]
    %v157 = vsub.f32 %v145, %v149
    %v158 = vsub.f32 %v146, %v150
    %v159 = vsub.f32 %v147, %v151
    %v160 = vsub.f32 %v148, %v152
    %v161 = vand.u32 2147483647, %v157
    %v162 = vand.u32 2147483647, %v158
    %v163 = vand.u32 2147483647, %v159
    %v164 = vand.u32 2147483647, %v160
    %vm165 = vcmp.lt.f32.partialorder %v161, 1.0
    %vm166 = vcmp.lt.f32.partialorder %v162, 1.0
    %vm167 = vcmp.lt.f32.partialorder %v163, 1.0
    %vm168 = vcmp.lt.f32.partialorder %v164, 1.0
    %v169 = vmul.f32 %v157, 0.5
    %v170 = vmul.f32 %v158, 0.5
    %v171 = vmul.f32 %v159, 0.5
    %v172 = vmul.f32 %v160, 0.5
    %v173 = vmul.f32 %v169, %v157
    %v174 = vmul.f32 %v170, %v158
    %v175 = vmul.f32 %v171, %v159
    %v176 = vmul.f32 %v172, %v160
    %v177 = vsub.f32 %v161, 0.5
    %v178 = vsub.f32 %v162, 0.5
    %v179 = vsub.f32 %v163, 0.5
    %v180 = vsub.f32 %v164, 0.5
    %v181 = vsel %vm165, %v173, %v177
    %v182 = vsel %vm166, %v174, %v178
    %v183 = vsel %vm167, %v175, %v179
    %v184 = vsel %vm168, %v176, %v180
    %v185 = vmul.f32 %v181, %v153
    %v186 = vmul.f32 %v182, %v154
    %v187 = vmul.f32 %v183, %v155
    %v188 = vmul.f32 %v184, %v156
    %v189 = vld [vmem:[#allocation2] sm:$0x3]
    %v192 = vcombine.high %v143, %v143
    %v194 = vunpack.c.l.s4 1983009808
    %v195 = vunpack.c.0.s8 %v194
    %v196 = vlaneseq
    %v197 = vshrl.u32 %v196, 7
    %v198 = vsub.s32 %v195, %v197
    %v199 = vrot.slane %v143, %v198
    %v201 = vunpack.c.l.s4 1983009808
    %v202 = vunpack.c.0.s8 %v201
    %v203 = vlaneseq
    %v204 = vshrl.u32 %v203, 7
    %v205 = vsub.s32 %v202, %v204
    %v206 = vrot.slane %v192, %v205
    %v207 = vcombine.high %v199, %v199
    %v208 = vcombine.high %v206, %v206
    %v209 = vcombine.high %v144, %v144
    %v211 = vunpack.c.l.s4 1983009808
    %v212 = vunpack.c.0.s8 %v211
    %v213 = vlaneseq
    %v214 = vshrl.u32 %v213, 7
    %v215 = vsub.s32 %v212, %v214
    %v216 = vrot.slane %v144, %v215
    %v218 = vunpack.c.l.s4 1983009808
    %v219 = vunpack.c.0.s8 %v218
    %v220 = vlaneseq
    %v221 = vshrl.u32 %v220, 7
    %v222 = vsub.s32 %v219, %v221
    %v223 = vrot.slane %v209, %v222
    %v224 = vcombine.high %v216, %v216
    %v225 = vcombine.high %v223, %v223
    %vm234 = vcmask 1041408
    %v235 = vsel %vm234, %v199, 0.0
    %v236 = vsel %vm234, %v207, 0.0
    %v237 = vadd.f32 %v235, %v236
    %v238 = vsel %vm234, %v206, 0.0
    %v239 = vadd.f32 %v237, %v238
    %v240 = vsel %vm234, %v208, 0.0
    %v241 = vadd.f32 %v239, %v240
    %v242 = vsel %vm234, %v216, 0.0
    %v243 = vadd.f32 %v241, %v242
    %v244 = vsel %vm234, %v224, 0.0
    %v245 = vadd.f32 %v243, %v244
    %v246 = vsel %vm234, %v223, 0.0
    %v247 = vadd.f32 %v245, %v246
    %v248 = vsel %vm234, %v225, 0.0
    %v249 = vadd.f32 %v247, %v248
    %250 = vadd.xlane.f32.xlu0 %v249
    %v251 = vpop.xlane.xlu0 %250
    %v252 = vadd.f32 %v189, %v251
    %vm253 = vcmask 1024
    %254 = vst.msk [vmem:[#allocation2] sm:$0x3] %vm253, %v252
    %v255 = vld [vmem:[#allocation3] sm:$0x3]
    %v258 = vcombine.high %v107, %v107
    %v260 = vunpack.c.l.s4 1983009808
    %v261 = vunpack.c.0.s8 %v260
    %v262 = vlaneseq
    %v263 = vshrl.u32 %v262, 7
    %v264 = vsub.s32 %v261, %v263
    %v265 = vrot.slane %v107, %v264
    %v267 = vunpack.c.l.s4 1983009808
    %v268 = vunpack.c.0.s8 %v267
    %v269 = vlaneseq
    %v270 = vshrl.u32 %v269, 7
    %v271 = vsub.s32 %v268, %v270
    %v272 = vrot.slane %v258, %v271
    %v273 = vcombine.high %v265, %v265
    %v274 = vcombine.high %v272, %v272
    %v275 = vcombine.high %v108, %v108
    %v277 = vunpack.c.l.s4 1983009808
    %v278 = vunpack.c.0.s8 %v277
    %v279 = vlaneseq
    %v280 = vshrl.u32 %v279, 7
    %v281 = vsub.s32 %v278, %v280
    %v282 = vrot.slane %v108, %v281
    %v284 = vunpack.c.l.s4 1983009808
    %v285 = vunpack.c.0.s8 %v284
    %v286 = vlaneseq
    %v287 = vshrl.u32 %v286, 7
    %v288 = vsub.s32 %v285, %v287
    %v289 = vrot.slane %v275, %v288
    %v290 = vcombine.high %v282, %v282
    %v291 = vcombine.high %v289, %v289
    %v300 = vsel %vm234, %v265, 0.0
    %v301 = vsel %vm234, %v273, 0.0
    %v302 = vadd.f32 %v300, %v301
    %v303 = vsel %vm234, %v272, 0.0
    %v304 = vadd.f32 %v302, %v303
    %v305 = vsel %vm234, %v274, 0.0
    %v306 = vadd.f32 %v304, %v305
    %v307 = vsel %vm234, %v282, 0.0
    %v308 = vadd.f32 %v306, %v307
    %v309 = vsel %vm234, %v290, 0.0
    %v310 = vadd.f32 %v308, %v309
    %v311 = vsel %vm234, %v289, 0.0
    %v312 = vadd.f32 %v310, %v311
    %v313 = vsel %vm234, %v291, 0.0
    %v314 = vadd.f32 %v312, %v313
    %315 = vadd.xlane.f32.xlu0 %v314
    %v316 = vpop.xlane.xlu0 %315
    %v317 = vadd.f32 %v255, %v316
    %318 = vst.msk [vmem:[#allocation3] sm:$0x3] %vm253, %v317
    %v319 = vld [vmem:[#allocation4] sm:$0x3]
    %v324 = vcombine.high %v185, %v185
    %v326 = vunpack.c.l.s4 1983009808
    %v327 = vunpack.c.0.s8 %v326
    %v328 = vlaneseq
    %v329 = vshrl.u32 %v328, 7
    %v330 = vsub.s32 %v327, %v329
    %v331 = vrot.slane %v185, %v330
    %v333 = vunpack.c.l.s4 1983009808
    %v334 = vunpack.c.0.s8 %v333
    %v335 = vlaneseq
    %v336 = vshrl.u32 %v335, 7
    %v337 = vsub.s32 %v334, %v336
    %v338 = vrot.slane %v324, %v337
    %v339 = vcombine.high %v331, %v331
    %v340 = vcombine.high %v338, %v338
    %v341 = vcombine.high %v186, %v186
    %v343 = vunpack.c.l.s4 1983009808
    %v344 = vunpack.c.0.s8 %v343
    %v345 = vlaneseq
    %v346 = vshrl.u32 %v345, 7
    %v347 = vsub.s32 %v344, %v346
    %v348 = vrot.slane %v186, %v347
    %v350 = vunpack.c.l.s4 1983009808
    %v351 = vunpack.c.0.s8 %v350
    %v352 = vlaneseq
    %v353 = vshrl.u32 %v352, 7
    %v354 = vsub.s32 %v351, %v353
    %v355 = vrot.slane %v341, %v354
    %v356 = vcombine.high %v348, %v348
    %v357 = vcombine.high %v355, %v355
    %v358 = vcombine.high %v187, %v187
    %v360 = vunpack.c.l.s4 1983009808
    %v361 = vunpack.c.0.s8 %v360
    %v362 = vlaneseq
    %v363 = vshrl.u32 %v362, 7
    %v364 = vsub.s32 %v361, %v363
    %v365 = vrot.slane %v187, %v364
    %v367 = vunpack.c.l.s4 1983009808
    %v368 = vunpack.c.0.s8 %v367
    %v369 = vlaneseq
    %v370 = vshrl.u32 %v369, 7
    %v371 = vsub.s32 %v368, %v370
    %v372 = vrot.slane %v358, %v371
    %v373 = vcombine.high %v365, %v365
    %v374 = vcombine.high %v372, %v372
    %v375 = vcombine.high %v188, %v188
    %v377 = vunpack.c.l.s4 1983009808
    %v378 = vunpack.c.0.s8 %v377
    %v379 = vlaneseq
    %v380 = vshrl.u32 %v379, 7
    %v381 = vsub.s32 %v378, %v380
    %v382 = vrot.slane %v188, %v381
    %v384 = vunpack.c.l.s4 1983009808
    %v385 = vunpack.c.0.s8 %v384
    %v386 = vlaneseq
    %v387 = vshrl.u32 %v386, 7
    %v388 = vsub.s32 %v385, %v387
    %v389 = vrot.slane %v375, %v388
    %v390 = vcombine.high %v382, %v382
    %v391 = vcombine.high %v389, %v389
    %v408 = vsel %vm234, %v331, 0.0
    %v409 = vsel %vm234, %v339, 0.0
    %v410 = vadd.f32 %v408, %v409
    %v411 = vsel %vm234, %v338, 0.0
    %v412 = vadd.f32 %v410, %v411
    %v413 = vsel %vm234, %v340, 0.0
    %v414 = vadd.f32 %v412, %v413
    %v415 = vsel %vm234, %v348, 0.0
    %v416 = vadd.f32 %v414, %v415
    %v417 = vsel %vm234, %v356, 0.0
    %v418 = vadd.f32 %v416, %v417
    %v419 = vsel %vm234, %v355, 0.0
    %v420 = vadd.f32 %v418, %v419
    %v421 = vsel %vm234, %v357, 0.0
    %v422 = vadd.f32 %v420, %v421
    %v423 = vsel %vm234, %v365, 0.0
    %v424 = vadd.f32 %v422, %v423
    %v425 = vsel %vm234, %v373, 0.0
    %v426 = vadd.f32 %v424, %v425
    %v427 = vsel %vm234, %v372, 0.0
    %v428 = vadd.f32 %v426, %v427
    %v429 = vsel %vm234, %v374, 0.0
    %v430 = vadd.f32 %v428, %v429
    %v431 = vsel %vm234, %v382, 0.0
    %v432 = vadd.f32 %v430, %v431
    %v433 = vsel %vm234, %v390, 0.0
    %v434 = vadd.f32 %v432, %v433
    %v435 = vsel %vm234, %v389, 0.0
    %v436 = vadd.f32 %v434, %v435
    %v437 = vsel %vm234, %v391, 0.0
    %v438 = vadd.f32 %v436, %v437
    %439 = vadd.xlane.f32.xlu0 %v438
    %v440 = vpop.xlane.xlu0 %439
    %v441 = vadd.f32 %v319, %v440
    %442 = vst.msk [vmem:[#allocation4] sm:$0x3] %vm253, %v441
    %v443 = vld [vmem:[#allocation5] sm:$0x3]
    %v448 = vcombine.high %v153, %v153
    %v450 = vunpack.c.l.s4 1983009808
    %v451 = vunpack.c.0.s8 %v450
    %v452 = vlaneseq
    %v453 = vshrl.u32 %v452, 7
    %v454 = vsub.s32 %v451, %v453
    %v455 = vrot.slane %v153, %v454
    %v457 = vunpack.c.l.s4 1983009808
    %v458 = vunpack.c.0.s8 %v457
    %v459 = vlaneseq
    %v460 = vshrl.u32 %v459, 7
    %v461 = vsub.s32 %v458, %v460
    %v462 = vrot.slane %v448, %v461
    %v463 = vcombine.high %v455, %v455
    %v464 = vcombine.high %v462, %v462
    %v465 = vcombine.high %v154, %v154
    %v467 = vunpack.c.l.s4 1983009808
    %v468 = vunpack.c.0.s8 %v467
    %v469 = vlaneseq
    %v470 = vshrl.u32 %v469, 7
    %v471 = vsub.s32 %v468, %v470
    %v472 = vrot.slane %v154, %v471
    %v474 = vunpack.c.l.s4 1983009808
    %v475 = vunpack.c.0.s8 %v474
    %v476 = vlaneseq
    %v477 = vshrl.u32 %v476, 7
    %v478 = vsub.s32 %v475, %v477
    %v479 = vrot.slane %v465, %v478
    %v480 = vcombine.high %v472, %v472
    %v481 = vcombine.high %v479, %v479
    %v482 = vcombine.high %v155, %v155
    %v484 = vunpack.c.l.s4 1983009808
    %v485 = vunpack.c.0.s8 %v484
    %v486 = vlaneseq
    %v487 = vshrl.u32 %v486, 7
    %v488 = vsub.s32 %v485, %v487
    %v489 = vrot.slane %v155, %v488
    %v491 = vunpack.c.l.s4 1983009808
    %v492 = vunpack.c.0.s8 %v491
    %v493 = vlaneseq
    %v494 = vshrl.u32 %v493, 7
    %v495 = vsub.s32 %v492, %v494
    %v496 = vrot.slane %v482, %v495
    %v497 = vcombine.high %v489, %v489
    %v498 = vcombine.high %v496, %v496
    %v499 = vcombine.high %v156, %v156
    %v501 = vunpack.c.l.s4 1983009808
    %v502 = vunpack.c.0.s8 %v501
    %v503 = vlaneseq
    %v504 = vshrl.u32 %v503, 7
    %v505 = vsub.s32 %v502, %v504
    %v506 = vrot.slane %v156, %v505
    %v508 = vunpack.c.l.s4 1983009808
    %v509 = vunpack.c.0.s8 %v508
    %v510 = vlaneseq
    %v511 = vshrl.u32 %v510, 7
    %v512 = vsub.s32 %v509, %v511
    %v513 = vrot.slane %v499, %v512
    %v514 = vcombine.high %v506, %v506
    %v515 = vcombine.high %v513, %v513
    %v532 = vsel %vm234, %v455, 0.0
    %v533 = vsel %vm234, %v463, 0.0
    %v534 = vadd.f32 %v532, %v533
    %v535 = vsel %vm234, %v462, 0.0
    %v536 = vadd.f32 %v534, %v535
    %v537 = vsel %vm234, %v464, 0.0
    %v538 = vadd.f32 %v536, %v537
    %v539 = vsel %vm234, %v472, 0.0
    %v540 = vadd.f32 %v538, %v539
    %v541 = vsel %vm234, %v480, 0.0
    %v542 = vadd.f32 %v540, %v541
    %v543 = vsel %vm234, %v479, 0.0
    %v544 = vadd.f32 %v542, %v543
    %v545 = vsel %vm234, %v481, 0.0
    %v546 = vadd.f32 %v544, %v545
    %v547 = vsel %vm234, %v489, 0.0
    %v548 = vadd.f32 %v546, %v547
    %v549 = vsel %vm234, %v497, 0.0
    %v550 = vadd.f32 %v548, %v549
    %v551 = vsel %vm234, %v496, 0.0
    %v552 = vadd.f32 %v550, %v551
    %v553 = vsel %vm234, %v498, 0.0
    %v554 = vadd.f32 %v552, %v553
    %v555 = vsel %vm234, %v506, 0.0
    %v556 = vadd.f32 %v554, %v555
    %v557 = vsel %vm234, %v514, 0.0
    %v558 = vadd.f32 %v556, %v557
    %v559 = vsel %vm234, %v513, 0.0
    %v560 = vadd.f32 %v558, %v559
    %v561 = vsel %vm234, %v515, 0.0
    %v562 = vadd.f32 %v560, %v561
    %563 = vadd.xlane.f32.xlu0 %v562
    %v564 = vpop.xlane.xlu0 %563
    %v565 = vadd.f32 %v443, %v564
    %566 = vst.msk [vmem:[#allocation5] sm:$0x3] %vm253, %v565
    // Predicated region
    $region54: #{tpu_custom_call.1} parent=1 // pred_check
      %p567 = pneg %p94
    $region55: #{tpu_custom_call.1} parent=1 // pred_check_branch
      %569 = sbr.rel (%p567) target = $region57
    $region56: #{tpu_custom_call.1} parent=1 // pred_region
      %v570 = vld [vmem:[#allocation2] sm:$0x3]
      %v571 = vsel %vm253, %v570, 0.0
      %572 = vadd.xlane.f32.xlu0 %v571
      %v573 = vpop.xlane.xlu0 %572
      %v574 = vrot.slane %v573, 4
      %v575 = vadd.f32 %v573, %v574
      %v576 = vrot.slane %v575, 2
      %v577 = vadd.f32 %v575, %v576
      %v578 = vrot.slane %v577, 1
      %v579 = vadd.f32 %v577, %v578
      %s580 = vtos %v579
      %v581 = vld [vmem:[#allocation3] sm:$0x3]
      %vm582 = vcmp.gt.f32.partialorder %v581, 0.0
      %v583 = vsel %vm582, 1, 0
      %v584 = vcvt.s32.f32 %v583
      %v585 = vsel %vm253, %v584, 0.0
      %586 = vadd.xlane.f32.xlu0 %v585
      %v587 = vpop.xlane.xlu0 %586
      %v588 = vrot.slane %v587, 4
      %v589 = vadd.f32 %v587, %v588
      %v590 = vrot.slane %v589, 2
      %v591 = vadd.f32 %v589, %v590
      %v592 = vrot.slane %v591, 1
      %v593 = vadd.f32 %v591, %v592
      %s594 = vtos %v593
      %v595 = vld [vmem:[#allocation4] sm:$0x3]
      %v596 = vsel %vm253, %v595, 0.0
      %597 = vadd.xlane.f32.xlu0 %v596
      %v598 = vpop.xlane.xlu0 %597
      %v599 = vrot.slane %v598, 4
      %v600 = vadd.f32 %v598, %v599
      %v601 = vrot.slane %v600, 2
      %v602 = vadd.f32 %v600, %v601
      %v603 = vrot.slane %v602, 1
      %v604 = vadd.f32 %v602, %v603
      %s605 = vtos %v604
      %v606 = vld [vmem:[#allocation5] sm:$0x3]
      %vm607 = vcmp.gt.f32.partialorder %v606, 0.0
      %v608 = vsel %vm607, 1, 0
      %v609 = vcvt.s32.f32 %v608
      %v610 = vsel %vm253, %v609, 0.0
      %611 = vadd.xlane.f32.xlu0 %v610
      %v612 = vpop.xlane.xlu0 %611
      %v613 = vrot.slane %v612, 4
      %v614 = vadd.f32 %v612, %v613
      %v615 = vrot.slane %v614, 2
      %v616 = vadd.f32 %v614, %v615
      %v617 = vrot.slane %v616, 1
      %v618 = vadd.f32 %v616, %v617
      %s619 = vtos %v618
      %v620 = vlaneseq
      %v621 = vand.u32 %v620, 127
      %vm622 = vcmp.eq.s32.totalorder %v621, 0
      %v623 = vstv %s580
      %v624 = vsel %vm622, %v623, 0.0
      %vm625 = vcmp.eq.s32.totalorder %v621, 1
      %v626 = vstv %s594
      %v627 = vsel %vm625, %v626, %v624
      %vm628 = vcmp.eq.s32.totalorder %v621, 2
      %v629 = vstv %s605
      %v630 = vsel %vm628, %v629, %v627
      %vm631 = vcmp.eq.s32.totalorder %v621, 3
      %v632 = vstv %s619
      %v633 = vsel %vm631, %v632, %v630
      %634 = vst [vmem:[#allocation17] sm:$0x1] %v633
    $region57: #{tpu_custom_call.1} parent=1 // pred_fallthru
      _
    // Predicated region
    $region58: #{tpu_custom_call.1} parent=1 // pred_check
      _
    $region59: #{tpu_custom_call.1} parent=1 // pred_check_branch
      %636 = sbr.rel (0) target = $region61
    $region60: #{tpu_custom_call.1} parent=1 // pred_region
      %s638 = ssub.s32 16, 16
      %639 = vsyncadd [#allocation8], %s638
      %s641 = sshll.u32 [#allocation17], 4
      %s642 = int_to_ptr.vmem [resolvable:$true] %s641
      %644 = dma.vmem_to_hbm [thread:$0]  %s642, 16, %s6, [#allocation8]
    $region61: #{tpu_custom_call.1} parent=1 // pred_fallthru
      _
    // Predicated region
    $region62: #{tpu_custom_call.1} parent=1 // pred_check
      _
    $region63: #{tpu_custom_call.1} parent=1 // pred_check_branch
      %646 = sbr.rel (0) target = $region65
    $region64: #{tpu_custom_call.1} parent=1 // pred_region
      %647 = dma.done [#allocation8], 16
    $region65: #{tpu_custom_call.1} parent=1 // pred_fallthru
      _
    %648 = vsyncpa [#allocation7], 1
    %649 = vsyncpa [#allocation10], 1
    %650 = vsyncpa [#allocation13], 1
    %651 = vsyncpa [#allocation16], 1
    %652 = vsyncpa [#allocation8], 1

</llo_original>
